<compile_context>
chip_gen: v7x
topology: tpu7x:2x2x1
jax: 0.10.0
libtpu: 0.0.40
codegen_flags: <defaults>
</compile_context>

<pallas_src>
import math
import functools

import jax
import jax.numpy as jnp
from jax import lax
from jax.experimental import pallas as pl
from jax.experimental.pallas import tpu as pltpu


def make_positional_encoding(d_model, seq_len, dtype=jnp.float32):
    """(seq_len, d_model) sinusoidal table, identical to the PyTorch module's buffer."""
    position = jnp.arange(seq_len, dtype=jnp.float32)[:, None]                 # (S, 1)
    div_term = jnp.exp(jnp.arange(0, d_model, 2, dtype=jnp.float32)
                       * (-math.log(10000.0) / d_model))                       # (D/2,)
    pe = jnp.zeros((seq_len, d_model), dtype=jnp.float32)
    pe = pe.at[:, 0::2].set(jnp.sin(position * div_term))
    pe = pe.at[:, 1::2].set(jnp.cos(position * div_term))
    return pe.astype(dtype)


def _hash_u32(x):
    """lowbias32 integer mixer: uint32 -> well-distributed uint32 (single round)."""
    x = x ^ (x >> 16)
    x = x * jnp.uint32(0x7FEB352D)
    x = x ^ (x >> 15)
    x = x * jnp.uint32(0x846CA68B)
    x = x ^ (x >> 16)
    return x


def _posenc_kernel(seed_ref, x_ref, pe_ref, o_ref, *,
                   apply_dropout, keep_threshold, inv_keep):
    """One (tr, tc) tile: out = dropout(x + pe).  PE block broadcasts if (1, tc)."""
    y = x_ref[...] + pe_ref[...]                       # VPU elementwise add

    if apply_dropout:
        tr, tc = x_ref.shape
        # Scalar-unit salt: unique per grid step; seed folded in BEFORE the single
        # hash round (one well-mixed round is plenty for a keep/drop compare).
        tile_id = pl.program_id(1) * pl.num_programs(0) + pl.program_id(0)
        salt = (tile_id.astype(jnp.uint32) * jnp.uint32(tr * tc)
                + seed_ref[0].astype(jnp.uint32) * jnp.uint32(0x9E3779B9))
        # In-tile flattened element index (iota casts are free bitcasts).
        rows = lax.broadcasted_iota(jnp.int32, (tr, tc), 0).astype(jnp.uint32)
        cols = lax.broadcasted_iota(jnp.int32, (tr, tc), 1).astype(jnp.uint32)
        bits = _hash_u32(rows * jnp.uint32(tc) + cols + salt)
        # keep with prob (1 - p): P(bits >= round(p * 2^32)) = 1 - p (uint32 compare).
        keep = bits >= jnp.uint32(keep_threshold)
        # Fused: one select + one multiply.  Scale stays in y's dtype (bf16
        # quantization of 1/(1-p) is ~0.4% and acceptable for dropout; widening to
        # f32 would double VALU width on bf16 inputs).
        scale = jnp.where(keep, jnp.asarray(inv_keep, dtype=y.dtype),
                          jnp.asarray(0, dtype=y.dtype))
        y = y * scale

    o_ref[...] = y.astype(o_ref.dtype)


# Per pipelined buffer budget.  x / PE / out blocks are each double-buffered
# -> worst case ~6 x _MAX_BLOCK_BYTES = 24 MiB, under the explicit 48 MiB limit
# (safe on v5e/v6e 128 MiB physical, headroom under v7x's 64 MiB physical).
_MAX_BLOCK_BYTES = 4 * 1024 * 1024
_VMEM_LIMIT_BYTES = 48 * 1024 * 1024


def _divisors(n):
    out = set()
    i = 1
    while i * i <= n:
        if n % i == 0:
            out.add(i)
            out.add(n // i)
        i += 1
    return sorted(out)


def _pick_col_tile(C, cap):
    cands = [d for d in _divisors(C) if (d % 128 == 0 or d == C)]
    fits = [d for d in cands if d <= cap]
    return max(fits) if fits else min(cands)


def _row_tile_candidates(R, period):
    # Row tiles must be a multiple of the PE row-period (so the PE block index is
    # constant along the inner grid axis) and satisfy the (8, 128) block rule.
    return [d for d in _divisors(R) if d % period == 0 and (d % 8 == 0 or d == R)]


def positional_encoding_forward(x, pe, *, dropout_p=0.0, training=False, seed=0):
    """x: (B, S, D) -> (B, S, D); out = inverted_dropout(x + pe) in x's dtype."""
    B, S, D = x.shape
    assert pe.shape == (S, D)
    assert 0.0 <= dropout_p < 1.0

    itemsize = jnp.dtype(x.dtype).itemsize
    max_block_elems = max(8 * 128, _MAX_BLOCK_BYTES // itemsize)

    # Layout selection (sublane/lane utilisation):
    #   A: rows = B*S, cols = D    -- lane-dense when D % 128 == 0 and avoids the
    #      8x sublane padding of (B, S*D) blocks when B < 8.
    #   B: rows = B,   cols = S*D  -- only when B >= 8, D not lane-dense but S*D is;
    #      PE becomes a single (1, tc) broadcast row.
    use_a = (D % 128 == 0) or (B < 8) or ((S * D) % 128 != 0)
    if use_a:
        R, C, period = B * S, D, S
        pe_base = pe.astype(x.dtype)                       # (S, D)
    else:
        R, C, period = B, S * D, 1
        pe_base = pe.astype(x.dtype).reshape(1, S * D)     # (1, S*D)
    x2 = x.reshape(R, C)

    tc = _pick_col_tile(C, max(128, max_block_elems // 8))
    row_cands = _row_tile_candidates(R, period)
    row_cap = max(8, max_block_elems // tc)
    fits = [d for d in row_cands if d <= row_cap]
    tr = max(fits) if fits else min(row_cands)

    # v7x megacore: guarantee >= 2 grid steps when possible so both TCs get work.
    if (C // tc) * (R // tr) < 2:
        smaller_r = [d for d in row_cands if d <= tr and R // d >= 2]
        if smaller_r:
            tr = max(smaller_r)
        else:
            smaller_c = [d for d in _divisors(C)
                         if (d % 128 == 0 or d == C) and d <= tc and C // d >= 2]
            if smaller_c:
                tc = max(smaller_c)

    if use_a:
        reps = tr // S                                     # tr is a multiple of S
        pe2 = pe_base if reps == 1 else jnp.tile(pe_base, (reps, 1))   # (tr, D)
        pe_rows = tr
    else:
        pe2 = pe_base                                      # (1, S*D)
        pe_rows = 1

    # Outer axis = column tiles, inner axis = row/batch tiles: the PE block index
    # depends only on the outer axis, so its DMA is skipped across all inner steps.
    grid = (C // tc, R // tr)

    apply_dropout = bool(training) and dropout_p > 0.0
    keep_threshold = (min(int(round(dropout_p * (1 << 32))), (1 << 32) - 1)
                      if apply_dropout else 0)
    inv_keep = 1.0 / (1.0 - dropout_p) if apply_dropout else 1.0

    kernel = functools.partial(
        _posenc_kernel,
        apply_dropout=apply_dropout,
        keep_threshold=keep_threshold,
        inv_keep=inv_keep,
    )
    seed_arr = jnp.array([seed], dtype=jnp.int32)

    out2 = pl.pallas_call(
        kernel,
        out_shape=jax.ShapeDtypeStruct((R, C), x.dtype),
        grid_spec=pltpu.PrefetchScalarGridSpec(
            num_scalar_prefetch=1,                                    # seed -> SMEM
            grid=grid,
            in_specs=[
                pl.BlockSpec((tr, tc), lambda c, r, seed: (r, c)),        # x tile
                pl.BlockSpec((pe_rows, tc), lambda c, r, seed: (0, c)),   # PE tile
            ],
            out_specs=pl.BlockSpec((tr, tc), lambda c, r, seed: (r, c)),
        ),
        compiler_params=pltpu.CompilerParams(
            # Stateless hash RNG -> no carried state; both axes parallel so v7x's
            # two TensorCores can split the grid.  No-op on v5e/v6e.
            dimension_semantics=("parallel", "parallel"),
            vmem_limit_bytes=_VMEM_LIMIT_BYTES,
        ),
    )(seed_arr, x2, pe2)

    return out2.reshape(B, S, D)


if __name__ == "__main__":
    # Small shapes consistent with the module: batch=2, seq=8, d_model=32.
    B, S, D = 2, 8, 32
    dropout_p = 0.1

    key = jax.random.PRNGKey(0)
    x = jax.random.normal(key, (B, S, D), dtype=jnp.float32)
    pe = make_positional_encoding(d_model=D, seq_len=S)

    # Eval mode: dropout is identity -> deterministic, check vs reference.
    out_eval = jax.block_until_ready(
        positional_encoding_forward(x, pe, dropout_p=dropout_p, training=False))
    ref = x + pe[None, :, :]
    assert jnp.allclose(out_eval, ref, atol=1e-6), "eval-mode mismatch vs reference"

    # Train mode: inverted dropout applied in-kernel (stateless uint32 hash RNG).
    out_train = jax.block_until_ready(
        positional_encoding_forward(x, pe, dropout_p=dropout_p, training=True, seed=42))
    assert out_train.shape == (B, S, D)
    # Each element is either dropped to 0 or equals (x + pe) / (1 - p).
    scaled = ref / (1.0 - dropout_p)
    ok = jnp.isclose(out_train, scaled, atol=1e-5) | jnp.isclose(out_train, 0.0, atol=1e-7)
    assert bool(jnp.all(ok)), "train-mode dropout output malformed"

    print("KERNEL_OK")
</pallas_src>

<mosaic_0001>
module attributes {stable_mosaic.version = 11 : i64} {
  func.func @_posenc_kernel(%arg0: i32, %arg1: i32, %arg2: memref<1xi32, #tpu.memory_space<smem>>, %arg3: memref<8x32xf32, #tpu.memory_space<vmem>>, %arg4: memref<8x32xf32, #tpu.memory_space<vmem>>, %arg5: memref<8x32xf32, #tpu.memory_space<vmem>>) attributes {dimension_semantics = [#tpu.dimension_semantics<parallel>, #tpu.dimension_semantics<parallel>], iteration_bounds = array<i64: 1, 2>, scalar_prefetch = 1 : i64, scratch_operands = 0 : i64, tpu.core_type = #tpu.core_type<tc>, window_params = [{transform_indices = @transform_0, window_bounds = array<i64: 8, 32>}, {transform_indices = @transform_1, window_bounds = array<i64: 8, 32>}, {transform_indices = @transform_2, window_bounds = array<i64: 8, 32>}]} {
    %c0 = arith.constant 0 : index
    %c0_0 = arith.constant 0 : index
    %0 = vector.load %arg3[%c0, %c0_0] : memref<8x32xf32, #tpu.memory_space<vmem>>, vector<8x32xf32>
    %c0_1 = arith.constant 0 : index
    %c0_2 = arith.constant 0 : index
    %1 = vector.load %arg4[%c0_1, %c0_2] : memref<8x32xf32, #tpu.memory_space<vmem>>, vector<8x32xf32>
    %2 = arith.addf %0, %1 : vector<8x32xf32>
    %c0_3 = arith.constant 0 : index
    %c0_4 = arith.constant 0 : index
    %3 = vector.load %arg5[%c0_3, %c0_4] : memref<8x32xf32, #tpu.memory_space<vmem>>, vector<8x32xf32>
    tpu.vector_store %arg5[%c0_3, %c0_4], %2 {strides = array<i32>} : memref<8x32xf32, #tpu.memory_space<vmem>>, vector<8x32xf32>,
    return
  }
  func.func @transform_0(%arg0: i32, %arg1: i32, %arg2: memref<1xi32, #tpu.memory_space<smem>>) -> (i32, i32) {
    %c0_i32 = arith.constant 0 : i32
    return %arg1, %arg0 : i32, i32
  }
  func.func @transform_1(%arg0: i32, %arg1: i32, %arg2: memref<1xi32, #tpu.memory_space<smem>>) -> (i32, i32) {
    %c0_i32 = arith.constant 0 : i32
    %c0_i32_0 = arith.constant 0 : i32
    return %c0_i32, %arg0 : i32, i32
  }
  func.func @transform_2(%arg0: i32, %arg1: i32, %arg2: memref<1xi32, #tpu.memory_space<smem>>) -> (i32, i32) {
    %c0_i32 = arith.constant 0 : i32
    return %arg1, %arg0 : i32, i32
  }
}

</mosaic_0001>

<llo_original>
// kernel: tpu_custom_call.1
$region0: #{tpu_custom_call.1}
  #allocation0 [shape = 'u32[]', space=smem, size = 0x4, offset = 0x4, fixed_abs, tag = 'smem constant byte address 0x4 - core index']
  #allocation1 [shape = 'u32[144,128]{1,0:T(1,128)}', space=vmem, size = 0x12000, scoped, tag = 'internal scratch']
  #allocation2 [shape = 's32[1]{0}', space=sflag, size = 0x4, scoped, tag = 'scoped memory for tpu_custom_call.1']
  #allocation3 [shape = 's32[1]{0:T(128)S(6)}', space=smem, size = 0x200, scoped, tag = 'prefetched SMEM operand 0']
  %s0 = inlined_call_operand.<no memory space> [shape: s32[1], index: 0, kind: input, shape index: {}]
  %s1 = inlined_call_operand.hbm [shape: f32[16,32], index: 1, kind: input, shape index: {}]
  %s2 = inlined_call_operand.hbm [shape: f32[8,32], index: 2, kind: input, shape index: {}]
  %s3 = inlined_call_operand.hbm [shape: f32[16,32], index: 3, kind: output, shape index: {}]
  %s4 = sld [smem:[#allocation0]]
  $region49: #{tpu_custom_call.1} parent=0
    _
  %s6 = ssub.s32 1, %s4
  %s7 = scalar_select 0, %s6, %s4
  %8 = sst [smem:[#allocation3]] %s0
  $region1: #{tpu_custom_call.1} parent=0
    #allocation4 [shape = 'u8[8192]{0}', space=vmem, size = 0x2000, scoped, tag = 'input window, operand 1']
    #allocation5 [shape = 's32[2]{0}', space=sflag, size = 0x8, scoped, tag = 'scoped memory for tpu_custom_call.1']
    #allocation6 [shape = 's32[2]{0}', space=sflag, size = 0x8, scoped, tag = 'scoped memory for tpu_custom_call.1']
    #allocation7 [shape = 'u8[4096]{0}', space=vmem, size = 0x1000, scoped, tag = 'input window, operand 2, single buffered']
    #allocation8 [shape = 's32[1]{0}', space=sflag, size = 0x4, scoped, tag = 'scoped memory for tpu_custom_call.1']
    #allocation9 [shape = 'u8[8192]{0}', space=vmem, size = 0x2000, scoped, tag = 'output window, operand 0']
    %9 = vsyncpa [#allocation5], 0
    %s10 = scalar_lea.sflag [#allocation5], 1
    %11 = vsyncpa %s10, 0
    %12 = vsyncpa [#allocation8], 0
    %13 = vsyncpa [#allocation6], 0
    %s14 = scalar_lea.sflag [#allocation6], 1
    %15 = vsyncpa %s14, 0
    loop: start=0, step=1, limit=4
    $region2: #{tpu_custom_call.1} parent=1 // loop_pre_header
      _
    $region3: #{tpu_custom_call.1} parent=1 // loop_header
      %s17 = sphi 0, %s21
      %p18 = scmp.ge.s32.totalorder %s17, 4
      %s24 = sphi 0, %s36
      %s25 = sphi 0, %s32
      %s26 = sphi 0, %s24
      %s27 = sphi 0, %s25
      %s28 = sphi 0, %s26
      %s29 = sphi 0, %s27
      %s41 = sphi 0, %s43
      %s44 = sphi 0, %s41
      %s45 = sphi 0, %s44
      %s61 = sphi 0, %s45
      %s67 = sphi 0, %s69
      %s70 = sphi 0, %s67
      %s71 = sphi 0, %s70
      %s87 = sphi 0, %s71
      %s95 = sphi 0, %s97
      %s98 = sphi 0, %s95
      %s99 = sphi 0, %s98
      %s115 = sphi 0, %s99
    $region4: #{tpu_custom_call.1} parent=1 // loop_header_branch
      %20 = sbr.rel (%p18) target = $region8
    $region5: #{tpu_custom_call.1} parent=1 // loop_body
      %s22 = ssub.s32 %s17, 1
      %s23 = ssub.s32 %s17, 2
      %s30 = sadd.s32 1, %s25
      %p31 = scmp.ge.s32.totalorder %s30, 2
      %s32 = scalar_select %p31, 0, %s30
      %s33 = sadd.s32 1, %s24
      %s34 = scalar_select %p31, %s33, %s24
      %p35 = scmp.ge.s32.totalorder %s34, 1
      %s36 = scalar_select %p35, 0, %s34
      %s37 = ssub.s32 %s25, %s32
      %s38 = ssub.s32 %s24, %s36
      %s39 = sor.u32 %s37, %s38
      %p40 = scmp.eq.s32.totalorder %s39, 0
      %s42 = sadd.s32 %s41, 1
      %s43 = scalar_select %p40, %s41, %s42
      %p46 = pneg %p40
      %p47 = scmp.eq.s32.totalorder %s17, 1
      %p48 = por %p46, %p47
      %p49 = scmp.ne.s32.totalorder %s41, %s44
      %p50 = scmp.eq.s32.totalorder %s17, 0
      %p51 = por %p49, %p50
      %p52 = scmp.ne.s32.totalorder %s41, %s44
      %p53 = scmp.eq.s32.totalorder %s22, 1
      %p54 = por %p52, %p53
      %p55 = scmp.ne.s32.totalorder %s44, %s45
      %p56 = scmp.eq.s32.totalorder %s22, 0
      %p57 = por %p55, %p56
      %p58 = scmp.ne.s32.totalorder %s44, %s45
      %p59 = scmp.eq.s32.totalorder %s23, 1
      %p60 = por %p58, %p59
      %p62 = scmp.ne.s32.totalorder %s45, %s61
      %p63 = scmp.eq.s32.totalorder %s23, 0
      %p64 = por %p62, %p63
      %s65 = ssub.s32 %s24, %s36
      %p66 = scmp.eq.s32.totalorder %s65, 0
      %s68 = sadd.s32 %s67, 1
      %s69 = scalar_select %p66, %s67, %s68
      %p72 = pneg %p66
      %p73 = scmp.eq.s32.totalorder %s17, 1
      %p74 = por %p72, %p73
      %p75 = scmp.ne.s32.totalorder %s67, %s70
      %p76 = scmp.eq.s32.totalorder %s17, 0
      %p77 = por %p75, %p76
      %p78 = scmp.ne.s32.totalorder %s67, %s70
      %p79 = scmp.eq.s32.totalorder %s22, 1
      %p80 = por %p78, %p79
      %p81 = scmp.ne.s32.totalorder %s70, %s71
      %p82 = scmp.eq.s32.totalorder %s22, 0
      %p83 = por %p81, %p82
      %p84 = scmp.ne.s32.totalorder %s70, %s71
      %p85 = scmp.eq.s32.totalorder %s23, 1
      %p86 = por %p84, %p85
      %p88 = scmp.ne.s32.totalorder %s71, %s87
      %p89 = scmp.eq.s32.totalorder %s23, 0
      %p90 = por %p88, %p89
      %s91 = ssub.s32 %s25, %s32
      %s92 = ssub.s32 %s24, %s36
      %s93 = sor.u32 %s91, %s92
      %p94 = scmp.eq.s32.totalorder %s93, 0
      %s96 = sadd.s32 %s95, 1
      %s97 = scalar_select %p94, %s95, %s96
      %p100 = pneg %p94
      %p101 = scmp.eq.s32.totalorder %s17, 1
      %p102 = por %p100, %p101
      %p103 = scmp.ne.s32.totalorder %s95, %s98
      %p104 = scmp.eq.s32.totalorder %s17, 0
      %p105 = por %p103, %p104
      %p106 = scmp.ne.s32.totalorder %s95, %s98
      %p107 = scmp.eq.s32.totalorder %s22, 1
      %p108 = por %p106, %p107
      %p109 = scmp.ne.s32.totalorder %s98, %s99
      %p110 = scmp.eq.s32.totalorder %s22, 0
      %p111 = por %p109, %p110
      %p112 = scmp.ne.s32.totalorder %s98, %s99
      %p113 = scmp.eq.s32.totalorder %s23, 1
      %p114 = por %p112, %p113
      %p116 = scmp.ne.s32.totalorder %s99, %s115
      %p117 = scmp.eq.s32.totalorder %s23, 0
      %p118 = por %p116, %p117
      %p119 = scmp.le.s32.totalorder 1, %s17
      %p120 = scmp.lt.s32.totalorder %s17, 3
      %p121 = pnand %p119, %p120
      %p122 = pneg %p121
      // Predicated region
      $region9: #{tpu_custom_call.1} parent=5 // pred_check
        _
      $region10: #{tpu_custom_call.1} parent=5 // pred_check_branch
        %124 = sbr.rel (%p121) target = $region12
      $region11: #{tpu_custom_call.1} parent=5 // pred_region
        %s125 = ssub.s32 %s17, 1
        // Predicated region
        $region13: #{tpu_custom_call.1} parent=11 // pred_check
          %p126 = pneg %p83
        $region14: #{tpu_custom_call.1} parent=11 // pred_check_branch
          %128 = sbr.rel (%p126) target = $region16
        $region15: #{tpu_custom_call.1} parent=11 // pred_region
          %s130 = ssub.s32 128, 128
          %131 = vsyncadd [#allocation8], %s130
          %s132 = smul.addr %s26, 128
          %s133 = scalar_lea.hbm %s2, %s132
          %s135 = sshll.u32 [#allocation7], 4
          %s136 = int_to_ptr.vmem [resolvable:$true] %s135
          %138 = dma.hbm_to_vmem [thread:$0]  %s133, 128, %s136, [#allocation8]
        $region16: #{tpu_custom_call.1} parent=11 // pred_fallthru
          _
      $region12: #{tpu_custom_call.1} parent=5 // pred_fallthru
        _
      %p139 = scmp.lt.s32.totalorder %s17, 2
      // Predicated region
      $region17: #{tpu_custom_call.1} parent=5 // pred_check
        %p140 = pneg %p139
      $region18: #{tpu_custom_call.1} parent=5 // pred_check_branch
        %142 = sbr.rel (%p140) target = $region20
      $region19: #{tpu_custom_call.1} parent=5 // pred_region
        // Predicated region
        $region21: #{tpu_custom_call.1} parent=19 // pred_check
          %p143 = pneg %p51
        $region22: #{tpu_custom_call.1} parent=19 // pred_check_branch
          %145 = sbr.rel (%p143) target = $region24
        $region23: #{tpu_custom_call.1} parent=19 // pred_region
          %s146 = sand.u32 %s41, 1
          %s147 = scalar_lea.sflag [#allocation5], %s146
          %s148 = sand.u32 %s41, 1
          %s149 = smul.addr %s148, 8
          %s150 = scalar_lea.vmem [#allocation4], %s149
          %s152 = ssub.s32 128, 128
          %153 = vsyncadd %s147, %s152
          %s154 = sadd.s32 %s24, %s25
          %s155 = smul.addr %s154, 128
          %s156 = scalar_lea.hbm %s1, %s155
          %s158 = sshll.u32 %s150, 4
          %s159 = int_to_ptr.vmem [resolvable:$true] %s158
          %161 = dma.hbm_to_vmem [thread:$0]  %s156, 128, %s159, %s147
        $region24: #{tpu_custom_call.1} parent=19 // pred_fallthru
          _
      $region20: #{tpu_custom_call.1} parent=5 // pred_fallthru
        _
      %p162 = scmp.le.s32.totalorder 1, %s17
      %p163 = scmp.lt.s32.totalorder %s17, 3
      %p164 = pnand %p162, %p163
      %p165 = pneg %p164
      // Predicated region
      $region25: #{tpu_custom_call.1} parent=5 // pred_check
        _
      $region26: #{tpu_custom_call.1} parent=5 // pred_check_branch
        %167 = sbr.rel (%p164) target = $region28
      $region27: #{tpu_custom_call.1} parent=5 // pred_region
        %s168 = ssub.s32 %s17, 1
        %s169 = sand.u32 %s44, 1
        %s170 = scalar_lea.sflag [#allocation5], %s169
        %s171 = sand.u32 %s44, 1
        %s172 = smul.addr %s171, 8
        %s173 = scalar_lea.vmem [#allocation4], %s172
        // Predicated region
        $region29: #{tpu_custom_call.1} parent=27 // pred_check
          %p174 = pneg %p57
        $region30: #{tpu_custom_call.1} parent=27 // pred_check_branch
          %176 = sbr.rel (%p174) target = $region32
        $region31: #{tpu_custom_call.1} parent=27 // pred_region
          %177 = dma.done %s170, 128
        $region32: #{tpu_custom_call.1} parent=27 // pred_fallthru
          _
        // Predicated region
        $region33: #{tpu_custom_call.1} parent=27 // pred_check
          %p178 = pneg %p83
        $region34: #{tpu_custom_call.1} parent=27 // pred_check_branch
          %180 = sbr.rel (%p178) target = $region36
        $region35: #{tpu_custom_call.1} parent=27 // pred_region
          %181 = dma.done [#allocation8], 128
        $region36: #{tpu_custom_call.1} parent=27 // pred_fallthru
          _
        %s182 = sand.u32 %s44, 1
        %s183 = scalar_lea.sflag [#allocation5], %s182
        %s184 = sand.u32 %s44, 1
        %s185 = smul.addr %s184, 8
        %s186 = scalar_lea.vmem [#allocation4], %s185
        %p187 = pneg %p57
        %p188 = pneg %p54
        %p189 = pneg %p83
        %p190 = pneg %p80
        %p191 = pneg %p111
        %p192 = pneg %p108
        %s193 = sand.u32 %s98, 1
        %s194 = scalar_lea.sflag [#allocation6], %s193
        %s195 = sand.u32 %s98, 1
        %s196 = smul.addr %s195, 8
        %s197 = scalar_lea.vmem [#allocation9], %s196
        %v198 = vld [vmem:[%s173] sm:$0xff]
        %v199 = vld [vmem:[#allocation7] sm:$0xff]
        %v200 = vadd.f32 %v198, %v199
        %vm201 = vcmask 261120
        %202 = vst.msk [vmem:[%s197] sm:$0xff] %vm201, %v200
        %s203 = sand.u32 %s98, 1
        %s204 = scalar_lea.sflag [#allocation6], %s203
        %s205 = sand.u32 %s98, 1
        %s206 = smul.addr %s205, 8
        %s207 = scalar_lea.vmem [#allocation9], %s206
        // Predicated region
        $region37: #{tpu_custom_call.1} parent=27 // pred_check
          %p208 = pneg %p108
        $region38: #{tpu_custom_call.1} parent=27 // pred_check_branch
          %210 = sbr.rel (%p208) target = $region40
        $region39: #{tpu_custom_call.1} parent=27 // pred_region
          %s212 = ssub.s32 128, 128
          %213 = vsyncadd %s204, %s212
          %s214 = sadd.s32 %s26, %s27
          %s215 = smul.addr %s214, 128
          %s216 = scalar_lea.hbm %s3, %s215
          %s218 = sshll.u32 %s207, 4
          %s219 = int_to_ptr.vmem [resolvable:$true] %s218
          %221 = dma.vmem_to_hbm [thread:$0]  %s219, 128, %s216, %s204
        $region40: #{tpu_custom_call.1} parent=27 // pred_fallthru
          _
      $region28: #{tpu_custom_call.1} parent=5 // pred_fallthru
        _
      %p222 = scmp.le.s32.totalorder 2, %s17
      // Predicated region
      $region41: #{tpu_custom_call.1} parent=5 // pred_check
        %p223 = pneg %p222
      $region42: #{tpu_custom_call.1} parent=5 // pred_check_branch
        %225 = sbr.rel (%p223) target = $region44
      $region43: #{tpu_custom_call.1} parent=5 // pred_region
        %s226 = ssub.s32 %s17, 2
        // Predicated region
        $region45: #{tpu_custom_call.1} parent=43 // pred_check
          %p227 = pneg %p114
        $region46: #{tpu_custom_call.1} parent=43 // pred_check_branch
          %229 = sbr.rel (%p227) target = $region48
        $region47: #{tpu_custom_call.1} parent=43 // pred_region
          %s230 = sand.u32 %s99, 1
          %s231 = scalar_lea.sflag [#allocation6], %s230
          %s232 = sand.u32 %s99, 1
          %s233 = smul.addr %s232, 8
          %s234 = scalar_lea.vmem [#allocation9], %s233
          %235 = dma.done %s231, 128
        $region48: #{tpu_custom_call.1} parent=43 // pred_fallthru
          _
      $region44: #{tpu_custom_call.1} parent=5 // pred_fallthru
        _
    $region6: #{tpu_custom_call.1} parent=1 // loop_footer
      %s21 = sadd.s32 1, %s17
    $region7: #{tpu_custom_call.1} parent=1 // loop_footer_branch
      %16 = sbr.rel target = $region3
    $region8: #{tpu_custom_call.1} parent=1 // loop_exit
      _
    %236 = vsyncpa [#allocation5], 1
    %s237 = scalar_lea.sflag [#allocation5], 1
    %238 = vsyncpa %s237, 1
    %239 = vsyncpa [#allocation8], 1
    %240 = vsyncpa [#allocation6], 1
    %s241 = scalar_lea.sflag [#allocation6], 1
    %242 = vsyncpa %s241, 1

</llo_original>
